<compile_context>
chip_gen: v7x
topology: tpu7x:2x2x1
jax: 0.10.0
libtpu: 0.0.40
codegen_flags: <defaults>
</compile_context>

<pallas_src>
import math
import functools
import numpy as np
import jax
import jax.numpy as jnp
from jax import lax
from jax.experimental import pallas as pl
from jax.experimental.pallas import tpu as pltpu


# ----------------------------------------------------------------------------
# Fused Pallas kernel: SincConv -> pool -> ReLU -> Conv1d(+bias) -> pool -> ReLU
# ----------------------------------------------------------------------------
def _sincnet_fused_kernel(im1_ref, w1_ref, w2a_ref, o_ref, *, k2, pool1, pool2):
    # im1_ref : (K1, pool1*HALF)   layer-1 im2col, columns permuted for split-max pool
    # w1_ref  : (C1, K1)           sinc filters
    # w2a_ref : (C2, K2*C1 + 1)    layer-2 weights (k-major/c_in-minor), last col = bias
    # o_ref   : (C2, HALF)         pooled layer-2 output (valid at lanes b*Lp1 + pool2*j)
    im1 = im1_ref[...]
    w1 = w1_ref[...]
    w2a = w2a_ref[...]
    half = im1.shape[1] // pool1

    # ---- layer 1: one MXU matmul over the whole batch ----
    h1 = jnp.dot(w1, im1, preferred_element_type=jnp.float32)        # (C1, pool1*HALF)

    # maxpool(pool1) + ReLU as a split max over vreg-aligned HALF-wide slabs
    # (slab r holds conv positions pool1*j + r) -> no lane relayout at all.
    hp1 = h1[:, :half]
    for r in range(1, pool1):
        hp1 = jnp.maximum(hp1, h1[:, r * half:(r + 1) * half])
    hp1 = jnp.maximum(hp1, 0.0)                                      # (C1, HALF)

    # ---- layer 2: im2col by lane-shifting the pooled slab, then ONE contraction ----
    def shift_left(a, k):
        # == jnp.roll(a, -k, axis=1); the cyclic wrap only touches pad/tail columns
        # that the wrapper never selects.
        return a if k == 0 else jnp.concatenate([a[:, k:], a[:, :k]], axis=1)

    im2 = jnp.concatenate([shift_left(hp1, k) for k in range(k2)], axis=0)  # (K2*C1, HALF)

    w2 = w2a[:, :-1]                                                 # (C2, K2*C1)
    b2 = w2a[:, -1:]                                                 # (C2, 1)
    h2 = jnp.dot(w2, im2, preferred_element_type=jnp.float32) + b2   # (C2, HALF)

    # maxpool(pool2) + ReLU as a neighbour max; valid results live at lanes
    # b*Lp1 + pool2*j and are compacted by the wrapper (tiny gather on ~8 KB).
    p = h2
    for s in range(1, pool2):
        p = jnp.maximum(p, shift_left(h2, s))
    o_ref[...] = jnp.maximum(p, 0.0)


# ----------------------------------------------------------------------------
# SincConv filter construction (tiny (C, K) parameter math, plain JAX)
# ----------------------------------------------------------------------------
def build_sinc_filters(low_hz_, band_hz_, window, n_, sample_rate, min_low_hz,
                       min_band_hz, kernel_size):
    low = min_low_hz / sample_rate + jnp.abs(low_hz_)                       # (C, 1)
    high = low + min_band_hz / sample_rate + jnp.abs(band_hz_)              # (C, 1)
    center = kernel_size // 2
    col = jnp.arange(kernel_size)[None, :]

    def sinc(v):
        # NaN-safe: non-zero denominator at the centre tap, then set the centre to
        # 1.0 (matches torch's sinc[:, K//2] = 1.0) -- keeps gradients clean.
        safe_v = jnp.where(col == center, 1.0, v)
        return jnp.where(col == center, 1.0, jnp.sin(safe_v) / safe_v)

    f_t = jnp.matmul(low, n_)
    low_pass1 = 2.0 * low * sinc(2.0 * math.pi * f_t * sample_rate)
    f_t = jnp.matmul(high, n_)
    low_pass2 = 2.0 * high * sinc(2.0 * math.pi * f_t * sample_rate)
    band_pass = low_pass2 - low_pass1
    band_pass = band_pass / jnp.max(band_pass, axis=1, keepdims=True)       # matches this SincConv variant
    return (band_pass * window).astype(jnp.float32)                         # (C, K)


def make_sinc_params(out_channels, kernel_size, sample_rate, min_low_hz, min_band_hz):
    to_mel = lambda hz: 2595.0 * np.log10(1.0 + hz / 700.0)
    to_hz = lambda mel: 700.0 * (10.0 ** (mel / 2595.0) - 1.0)
    low_hz = 30.0
    high_hz = sample_rate / 2.0 - (min_low_hz + min_band_hz)
    mel = np.linspace(to_mel(low_hz), to_mel(high_hz), out_channels + 1)
    hz = to_hz(mel) / sample_rate
    low_hz_ = hz[:-1].reshape(-1, 1).astype(np.float32)
    band_hz_ = np.diff(hz).reshape(-1, 1).astype(np.float32)
    n_lin = np.linspace(0.0, kernel_size, kernel_size)                      # torch.linspace(0,K,steps=K)
    window = (0.54 - 0.46 * np.cos(2.0 * math.pi * n_lin / kernel_size)).astype(np.float32)
    n = (kernel_size - 1) / 2.0
    n_ = (np.arange(-n, n + 1).reshape(1, -1) / sample_rate).astype(np.float32)
    return (jnp.asarray(low_hz_), jnp.asarray(band_hz_),
            jnp.asarray(window), jnp.asarray(n_))


# ----------------------------------------------------------------------------
# Forward (single fused pallas_call) and pure-JAX reference
# ----------------------------------------------------------------------------
def sincnet_forward(x, params, opts):
    """x: (B, seq_len) f32 waveforms -> (B, N_filt2 * out_len) flattened features."""
    B, L_in = x.shape
    K1, K2 = opts["sinc_len_filt"]
    pool1, pool2 = opts["sinc_max_pool_len"]
    C1, C2 = opts["sinc_N_filt"]
    L1 = L_in - K1 + 1
    Lp1 = L1 // pool1
    L2 = Lp1 - K2 + 1
    Lp2 = L2 // pool2

    filters = build_sinc_filters(params["low_hz_"], params["band_hz_"],
                                 params["window"], params["n_"],
                                 opts["sinc_sample_rate"], opts["sinc_min_low_hz"],
                                 opts["sinc_min_band_hz"], K1)               # (C1, K1)

    # Layer-2 weight: (C2, C1, K2) -> (C2, K2*C1), k-major / c_in-minor to match the
    # in-kernel im2col row layout; bias packed as one extra column (broadcast-added
    # in-kernel, no separate DMA stream and no ones-row in the contraction).
    w2_flat = jnp.transpose(params["w2"], (0, 2, 1)).reshape(C2, K2 * C1)
    w2_aug = jnp.concatenate([w2_flat, params["b2"].reshape(C2, 1)], axis=1)  # (C2, K2*C1+1)

    # Layer-1 im2col precomputed by XLA (cheap, hides in the input DMA) with columns
    # permuted per pooling phase and padded to a 128-lane multiple so every in-kernel
    # slice is vreg-aligned:
    #   part r (width HALF): column b*Lp1 + j holds the window starting at pool1*j + r.
    half = ((B * Lp1 + 127) // 128) * 128                                     # 128 here
    k_idx = jnp.arange(K1)[:, None]                                           # (K1, 1)

    def build_part(r):
        t = r + pool1 * jnp.arange(Lp1)                                       # (Lp1,)
        g = x[:, t[None, :] + k_idx]                                          # (B, K1, Lp1)
        g = jnp.transpose(g, (1, 0, 2)).reshape(K1, B * Lp1)                  # b-major columns
        return jnp.pad(g, ((0, 0), (0, half - B * Lp1)))

    im1 = jnp.concatenate([build_part(r) for r in range(pool1)], axis=1)      # (K1, pool1*half)

    kernel = functools.partial(_sincnet_fused_kernel, k2=K2, pool1=pool1, pool2=pool2)
    out = pl.pallas_call(
        kernel,
        out_shape=jax.ShapeDtypeStruct((C2, half), jnp.float32),
        grid=(1,),                                    # single step: whole (tiny) batch at once
        in_specs=[
            pl.BlockSpec((K1, pool1 * half), lambda i: (0, 0)),
            pl.BlockSpec((C1, K1), lambda i: (0, 0)),
            pl.BlockSpec((C2, K2 * C1 + 1), lambda i: (0, 0)),
        ],
        out_specs=pl.BlockSpec((C2, half), lambda i: (0, 0)),
        compiler_params=pltpu.CompilerParams(dimension_semantics=("arbitrary",)),
    )(im1, filters, w2_aug)

    # Compact the valid pooled columns (b*Lp1 + pool2*j) and lay out as (B, C2*Lp2).
    cols = (jnp.arange(B)[:, None] * Lp1 + pool2 * jnp.arange(Lp2)[None, :]).reshape(-1)
    feats = out[:, cols].reshape(C2, B, Lp2)                                   # (C2, B, Lp2)
    return jnp.transpose(feats, (1, 0, 2)).reshape(B, C2 * Lp2)


def sincnet_reference(x, params, opts):
    B, seq_len = x.shape
    h = x.reshape(B, 1, seq_len)
    filters = build_sinc_filters(params["low_hz_"], params["band_hz_"],
                                 params["window"], params["n_"],
                                 opts["sinc_sample_rate"], opts["sinc_min_low_hz"],
                                 opts["sinc_min_band_hz"], opts["sinc_len_filt"][0])

    def conv1d(inp, w):
        return lax.conv_general_dilated(inp, w, window_strides=(1,), padding="VALID",
                                        dimension_numbers=("NCH", "OIH", "NCH"))

    def pool_relu(inp, pool):
        Bn, C, L = inp.shape
        Lp = L // pool
        p = jnp.max(inp[:, :, : Lp * pool].reshape(Bn, C, Lp, pool), axis=3)
        return jnp.maximum(p, 0.0)

    h = pool_relu(conv1d(h, filters[:, None, :]), opts["sinc_max_pool_len"][0])
    h = conv1d(h, params["w2"]) + params["b2"][None, :, None]
    h = pool_relu(h, opts["sinc_max_pool_len"][1])
    return h.reshape(B, -1)


# ----------------------------------------------------------------------------
if __name__ == "__main__":
    options = {
        "sinc_N_filt": [8, 16],
        "sinc_len_filt": [17, 5],
        "sinc_max_pool_len": [2, 2],
        "sinc_act": ["relu", "relu"],
        "sinc_drop": [0.0, 0.0],
        "sinc_use_laynorm": [False, False],
        "sinc_use_batchnorm": [False, False],
        "sinc_use_laynorm_inp": False,
        "sinc_use_batchnorm_inp": False,
        "sinc_sample_rate": 16000,
        "sinc_min_low_hz": 50,
        "sinc_min_band_hz": 50,
    }
    inp_dim = 128
    batch = 2

    # deterministic SincConv parameters (same init as the PyTorch module)
    low_hz_, band_hz_, window, n_ = make_sinc_params(
        options["sinc_N_filt"][0], options["sinc_len_filt"][0],
        options["sinc_sample_rate"], options["sinc_min_low_hz"], options["sinc_min_band_hz"])

    key = jax.random.PRNGKey(0)
    kx, kw, kb = jax.random.split(key, 3)
    C_in2, C_out2, K2 = options["sinc_N_filt"][0], options["sinc_N_filt"][1], options["sinc_len_filt"][1]
    bound = 1.0 / math.sqrt(C_in2 * K2)
    w2 = jax.random.uniform(kw, (C_out2, C_in2, K2), jnp.float32, -bound, bound)
    b2 = jax.random.uniform(kb, (C_out2,), jnp.float32, -bound, bound)

    params = {"low_hz_": low_hz_, "band_hz_": band_hz_, "window": window, "n_": n_,
              "w2": w2, "b2": b2}

    x = jax.random.normal(kx, (batch, inp_dim), jnp.float32)

    out = jax.jit(lambda xx: sincnet_forward(xx, params, options))(x)
    out = jax.block_until_ready(out)

    ref = jax.block_until_ready(sincnet_reference(x, params, options))

    assert out.shape == (batch, 16 * 26), out.shape
    np.testing.assert_allclose(np.asarray(out), np.asarray(ref), rtol=1e-3, atol=1e-3)

    print("KERNEL_OK")
</pallas_src>

<mosaic_0001>
module attributes {stable_mosaic.version = 11 : i64} {
  func.func @_sincnet_fused_kernel(%arg0: i32, %arg1: memref<17x256xf32, #tpu.memory_space<vmem>>, %arg2: memref<8x17xf32, #tpu.memory_space<vmem>>, %arg3: memref<16x41xf32, #tpu.memory_space<vmem>>, %arg4: memref<16x128xf32, #tpu.memory_space<vmem>>) attributes {dimension_semantics = [#tpu.dimension_semantics<arbitrary>], iteration_bounds = array<i64: 1>, scalar_prefetch = 0 : i64, scratch_operands = 0 : i64, tpu.core_type = #tpu.core_type<tc>, window_params = [{pipeline_mode = #tpu.pipeline_mode<synchronous>, transform_indices = @transform_0, window_bounds = array<i64: 17, 256>}, {pipeline_mode = #tpu.pipeline_mode<synchronous>, transform_indices = @transform_1, window_bounds = array<i64: 8, 17>}, {pipeline_mode = #tpu.pipeline_mode<synchronous>, transform_indices = @transform_2, window_bounds = array<i64: 16, 41>}, {pipeline_mode = #tpu.pipeline_mode<synchronous>, transform_indices = @transform_3, window_bounds = array<i64: 16, 128>}]} {
    %c0 = arith.constant 0 : index
    %c0_0 = arith.constant 0 : index
    %0 = vector.load %arg1[%c0, %c0_0] : memref<17x256xf32, #tpu.memory_space<vmem>>, vector<17x256xf32>
    %c0_1 = arith.constant 0 : index
    %c0_2 = arith.constant 0 : index
    %1 = vector.load %arg2[%c0_1, %c0_2] : memref<8x17xf32, #tpu.memory_space<vmem>>, vector<8x17xf32>
    %c0_3 = arith.constant 0 : index
    %c0_4 = arith.constant 0 : index
    %2 = vector.load %arg3[%c0_3, %c0_4] : memref<16x41xf32, #tpu.memory_space<vmem>>, vector<16x41xf32>
    %cst = arith.constant dense<0.000000e+00> : vector<8x256xf32>
    %3 = tpu.matmul %1, %0, %cst {dimension_numbers = #tpu.dot_dimension_numbers<[1], [0], [0], [1], [0, 0, 1, 1], [], []>} : vector<8x17xf32>, vector<17x256xf32>, vector<8x256xf32> -> vector<8x256xf32>
    %4 = vector.extract_strided_slice %3 {offsets = [0, 0], sizes = [8, 128], strides = [1, 1]} : vector<8x256xf32> to vector<8x128xf32>
    %5 = vector.extract_strided_slice %3 {offsets = [0, 128], sizes = [8, 128], strides = [1, 1]} : vector<8x256xf32> to vector<8x128xf32>
    %6 = arith.maximumf %4, %5 : vector<8x128xf32>
    %cst_5 = arith.constant 0.000000e+00 : f32
    %7 = vector.broadcast %cst_5 : f32 to vector<8x128xf32>
    %8 = arith.maximumf %6, %7 : vector<8x128xf32>
    %9 = vector.extract_strided_slice %8 {offsets = [0, 1], sizes = [8, 127], strides = [1, 1]} : vector<8x128xf32> to vector<8x127xf32>
    %10 = vector.extract_strided_slice %8 {offsets = [0, 0], sizes = [8, 1], strides = [1, 1]} : vector<8x128xf32> to vector<8x1xf32>
    %11 = tpu.concatenate %9, %10 in 1 : vector<8x127xf32>, vector<8x1xf32> -> vector<8x128xf32>
    %12 = vector.extract_strided_slice %8 {offsets = [0, 2], sizes = [8, 126], strides = [1, 1]} : vector<8x128xf32> to vector<8x126xf32>
    %13 = vector.extract_strided_slice %8 {offsets = [0, 0], sizes = [8, 2], strides = [1, 1]} : vector<8x128xf32> to vector<8x2xf32>
    %14 = tpu.concatenate %12, %13 in 1 : vector<8x126xf32>, vector<8x2xf32> -> vector<8x128xf32>
    %15 = vector.extract_strided_slice %8 {offsets = [0, 3], sizes = [8, 125], strides = [1, 1]} : vector<8x128xf32> to vector<8x125xf32>
    %16 = vector.extract_strided_slice %8 {offsets = [0, 0], sizes = [8, 3], strides = [1, 1]} : vector<8x128xf32> to vector<8x3xf32>
    %17 = tpu.concatenate %15, %16 in 1 : vector<8x125xf32>, vector<8x3xf32> -> vector<8x128xf32>
    %18 = vector.extract_strided_slice %8 {offsets = [0, 4], sizes = [8, 124], strides = [1, 1]} : vector<8x128xf32> to vector<8x124xf32>
    %19 = vector.extract_strided_slice %8 {offsets = [0, 0], sizes = [8, 4], strides = [1, 1]} : vector<8x128xf32> to vector<8x4xf32>
    %20 = tpu.concatenate %18, %19 in 1 : vector<8x124xf32>, vector<8x4xf32> -> vector<8x128xf32>
    %21 = tpu.concatenate %8, %11, %14, %17, %20 in 0 : vector<8x128xf32>, vector<8x128xf32>, vector<8x128xf32>, vector<8x128xf32>, vector<8x128xf32> -> vector<40x128xf32>
    %22 = vector.extract_strided_slice %2 {offsets = [0, 0], sizes = [16, 40], strides = [1, 1]} : vector<16x41xf32> to vector<16x40xf32>
    %23 = vector.extract_strided_slice %2 {offsets = [0, 40], sizes = [16, 1], strides = [1, 1]} : vector<16x41xf32> to vector<16x1xf32>
    %cst_6 = arith.constant dense<0.000000e+00> : vector<16x128xf32>
    %24 = tpu.matmul %22, %21, %cst_6 {dimension_numbers = #tpu.dot_dimension_numbers<[1], [0], [0], [1], [0, 0, 1, 1], [], []>} : vector<16x40xf32>, vector<40x128xf32>, vector<16x128xf32> -> vector<16x128xf32>
    %25 = vector.broadcast %23 : vector<16x1xf32> to vector<16x128xf32>
    %26 = arith.addf %24, %25 : vector<16x128xf32>
    %27 = vector.extract_strided_slice %26 {offsets = [0, 1], sizes = [16, 127], strides = [1, 1]} : vector<16x128xf32> to vector<16x127xf32>
    %28 = vector.extract_strided_slice %26 {offsets = [0, 0], sizes = [16, 1], strides = [1, 1]} : vector<16x128xf32> to vector<16x1xf32>
    %29 = tpu.concatenate %27, %28 in 1 : vector<16x127xf32>, vector<16x1xf32> -> vector<16x128xf32>
    %30 = arith.maximumf %26, %29 : vector<16x128xf32>
    %cst_7 = arith.constant 0.000000e+00 : f32
    %31 = vector.broadcast %cst_7 : f32 to vector<16x128xf32>
    %32 = arith.maximumf %30, %31 : vector<16x128xf32>
    %c0_8 = arith.constant 0 : index
    %c0_9 = arith.constant 0 : index
    %33 = vector.load %arg4[%c0_8, %c0_9] : memref<16x128xf32, #tpu.memory_space<vmem>>, vector<16x128xf32>
    tpu.vector_store %arg4[%c0_8, %c0_9], %32 {strides = array<i32>} : memref<16x128xf32, #tpu.memory_space<vmem>>, vector<16x128xf32>,
    return
  }
  func.func @transform_0(%arg0: i32) -> (i32, i32) {
    %c0_i32 = arith.constant 0 : i32
    %c0_i32_0 = arith.constant 0 : i32
    %c0_i32_1 = arith.constant 0 : i32
    return %c0_i32, %c0_i32_0 : i32, i32
  }
  func.func @transform_1(%arg0: i32) -> (i32, i32) {
    %c0_i32 = arith.constant 0 : i32
    %c0_i32_0 = arith.constant 0 : i32
    %c0_i32_1 = arith.constant 0 : i32
    return %c0_i32, %c0_i32_0 : i32, i32
  }
  func.func @transform_2(%arg0: i32) -> (i32, i32) {
    %c0_i32 = arith.constant 0 : i32
    %c0_i32_0 = arith.constant 0 : i32
    %c0_i32_1 = arith.constant 0 : i32
    return %c0_i32, %c0_i32_0 : i32, i32
  }
  func.func @transform_3(%arg0: i32) -> (i32, i32) {
    %c0_i32 = arith.constant 0 : i32
    %c0_i32_0 = arith.constant 0 : i32
    %c0_i32_1 = arith.constant 0 : i32
    return %c0_i32, %c0_i32_0 : i32, i32
  }
}

</mosaic_0001>

<llo_original>
// kernel: _lambda_.1
$region0: #{_lambda_.1}
  #allocation0 [shape = 'u32[]', space=smem, size = 0x4, offset = 0x4, fixed_abs, tag = 'smem constant byte address 0x4 - core index']
  #allocation1 [shape = 'u32[144,128]{1,0:T(1,128)}', space=vmem, size = 0x12000, scoped, tag = 'internal scratch']
  %s0 = inlined_call_operand.vmem [shape: f32[17,256], index: 0, kind: input, shape index: {}]
  %s1 = inlined_call_operand.vmem [shape: f32[8,17], index: 1, kind: input, shape index: {}]
  %s2 = inlined_call_operand.vmem [shape: f32[16,41], index: 2, kind: input, shape index: {}]
  %s3 = inlined_call_operand.vmem [shape: f32[16,128], index: 3, kind: output, shape index: {}]
  %s4 = sld [smem:[#allocation0]]
  $region22: #{_lambda_.1} parent=0
    _
  %s6 = ssub.s32 1, %s4
  %s7 = scalar_select 0, %s6, %s4
  // Predicated region
  $region2: #{_lambda_.1} parent=0 // pred_check
    _
  $region3: #{_lambda_.1} parent=0 // pred_check_branch
    %9 = sbr.rel (0) target = $region5
  $region4: #{_lambda_.1} parent=0 // pred_region
    _
  $region5: #{_lambda_.1} parent=0 // pred_fallthru
    _
  // Predicated region
  $region6: #{_lambda_.1} parent=0 // pred_check
    _
  $region7: #{_lambda_.1} parent=0 // pred_check_branch
    %11 = sbr.rel (0) target = $region9
  $region8: #{_lambda_.1} parent=0 // pred_region
    _
  $region9: #{_lambda_.1} parent=0 // pred_fallthru
    _
  // Predicated region
  $region10: #{_lambda_.1} parent=0 // pred_check
    _
  $region11: #{_lambda_.1} parent=0 // pred_check_branch
    %13 = sbr.rel (0) target = $region13
  $region12: #{_lambda_.1} parent=0 // pred_region
    _
  $region13: #{_lambda_.1} parent=0 // pred_fallthru
    _
  %v14 = vld [vmem:[%s0] sm:$0xff]
  %v15 = vld [vmem:[%s0 + $0x8] sm:$0xff]
  %v16 = vld [vmem:[%s0 + $0x10] sm:$0xff]
  %v17 = vld [vmem:[%s0 + $0x18] sm:$0xff]
  %v18 = vld [vmem:[%s0 + $0x20] sm:$0x1]
  %v19 = vld [vmem:[%s0 + $0x28] sm:$0x1]
  %v20 = vld [vmem:[%s1] sm:$0xff]
  %v21 = vld [vmem:[%s2] sm:$0xff]
  %v22 = vld [vmem:[%s2 + $0x8] sm:$0xff]
  %vm23 = vcmask 138240
  %v25 = vsel %vm23, %v20, 0
  %vm27 = vcmask 1040384
  %v29 = vsel %vm27, %v18, 0
  %v32 = vsel %vm27, %v19, 0
  %34 = vmatprep.subr.mxu0 %v15
  %35 = vmatpush1.msra.mxu0 %v14
  %36 = vmatprep.subr.mxu0 %v17
  %37 = vmatpush1.msra.mxu0 %v16
  %38 = vmatprep.subr.mxu0 %v32
  %39 = vmatpush1.msra.mxu0 %v29
  %40 = vmatprep.subr.mxu0 0.0
  %41 = vmatpush1.msra.mxu0 0.0
  %42 = vmatprep.subr.mxu0 0.0
  %43 = vmatpush1.msra.mxu0 0.0
  %44 = vmatprep.subr.mxu0 0.0
  %45 = vmatpush1.msra.mxu0 0.0
  %46 = vmatprep.subr.mxu0 0.0
  %47 = vmatpush1.msra.mxu0 0.0
  %48 = vmatprep.subr.mxu0 0.0
  %49 = vmatpush1.msra.mxu0 0.0
  %50 = vmatprep.subr.mxu0 0.0
  %51 = vmatpush1.msra.mxu0 0.0
  %52 = vmatprep.subr.mxu0 0.0
  %53 = vmatpush1.msra.mxu0 0.0
  %54 = vmatprep.subr.mxu0 0.0
  %55 = vmatpush1.msra.mxu0 0.0
  %56 = vmatprep.subr.mxu0 0.0
  %57 = vmatpush1.msra.mxu0 0.0
  %58 = vmatprep.subr.mxu0 0.0
  %59 = vmatpush1.msra.mxu0 0.0
  %60 = vmatprep.subr.mxu0 0.0
  %61 = vmatpush1.msra.mxu0 0.0
  %62 = vmatprep.subr.mxu0 0.0
  %63 = vmatpush1.msra.mxu0 0.0
  %64 = vmatprep.subr.mxu0 0.0
  %65 = vmatpush1.msra.mxu0 0.0
  %66 = vmatprep.subr.mxu0 0.0
  %67 = vmatpush1.msra.mxu0 0.0
  %68 = vmatprep.subr.mxu0 0.0
  %69 = vmatpush1.msra.mxu0 0.0
  %70 = vmatprep.subr.mxu0 0.0
  %71 = vmatpush1.msra.mxu0 0.0
  %72 = vmatprep.subr.mxu0 0.0
  %73 = vmatpush1.msra.mxu0 0.0
  %74 = vmatprep.subr.mxu0 0.0
  %75 = vmatpush1.msra.mxu0 0.0
  %76 = vmatprep.subr.mxu0 0.0
  %77 = vmatpush1.msra.mxu0 0.0
  %78 = vmatprep.subr.mxu0 0.0
  %79 = vmatpush1.msra.mxu0 0.0
  %80 = vmatprep.subr.mxu0 0.0
  %81 = vmatpush1.msra.mxu0 0.0
  %82 = vmatprep.subr.mxu0 0.0
  %83 = vmatpush1.msra.mxu0 0.0
  %84 = vmatprep.subr.mxu0 0.0
  %85 = vmatpush1.msra.mxu0 0.0
  %86 = vmatprep.subr.mxu0 0.0
  %87 = vmatpush1.msra.mxu0 0.0
  %88 = vmatprep.subr.mxu0 0.0
  %89 = vmatpush1.msra.mxu0 0.0
  %90 = vmatprep.subr.mxu0 0.0
  %91 = vmatpush1.msra.mxu0 0.0
  %92 = vmatprep.subr.mxu0 0.0
  %93 = vmatpush1.msra.mxu0 0.0
  %94 = vmatprep.subr.mxu0 0.0
  %95 = vmatpush1.msra.mxu0 0.0
  %96 = vmatprep.subr.mxu0 0.0
  %97 = vmatpush1.msra.mxu0 0.0
  %98 = vmatprep.mubr.f32.mxu0 0.0
  %99 = vmatmul.mubr.f32.gmra.mrb[0].mxu0 %v25
  %v100 = vpop.f32.mrb[0].mxu0
  %v101 = vadd.f32 0.0, %v100
  %v102 = vpop.f32.mrb[0].mxu0
  %v103 = vadd.f32 0.0, %v102
  %104 = vdwg.mxu0
  %v105 = vmax.f32 %v101, %v103
  %v106 = vmax.f32 %v105, 0.0
  %108 = vrot.lane.b32.xlu0 %v106, 127
  %v109 = vpop.permute.xlu0 %108
  %111 = vrot.lane.b32.xlu0 %v106, 126
  %v112 = vpop.permute.xlu0 %111
  %114 = vrot.lane.b32.xlu0 %v106, 125
  %v115 = vpop.permute.xlu0 %114
  %117 = vrot.lane.b32.xlu0 %v106, 124
  %v118 = vpop.permute.xlu0 %117
  %121 = vset.pattern.permute.xlu0 40
  %122 = vperm.xlu0 %121, %v21
  %v123 = vpop.permute.xlu0 %122
  %126 = vset.pattern.permute.xlu0 40
  %127 = vperm.xlu0 %126, %v22
  %v128 = vpop.permute.xlu0 %127
  %vm130 = vcmask 326656
  %v131 = vsel %vm130, %v21, 0
  %v133 = vsel %vm130, %v22, 0
  %135 = vmatprep.subr.mxu0 0.0
  %136 = vmatpush1.msra.mxu0 %v106
  %137 = vmatprep.subr.mxu0 0.0
  %138 = vmatpush1.msra.mxu0 %v109
  %139 = vmatprep.subr.mxu0 0.0
  %140 = vmatpush1.msra.mxu0 %v112
  %141 = vmatprep.subr.mxu0 0.0
  %142 = vmatpush1.msra.mxu0 %v115
  %143 = vmatprep.subr.mxu0 0.0
  %144 = vmatpush1.msra.mxu0 %v118
  %145 = vmatprep.subr.mxu0 0.0
  %146 = vmatpush1.msra.mxu0 0.0
  %147 = vmatprep.subr.mxu0 0.0
  %148 = vmatpush1.msra.mxu0 0.0
  %149 = vmatprep.subr.mxu0 0.0
  %150 = vmatpush1.msra.mxu0 0.0
  %151 = vmatprep.subr.mxu0 0.0
  %152 = vmatpush1.msra.mxu0 0.0
  %153 = vmatprep.subr.mxu0 0.0
  %154 = vmatpush1.msra.mxu0 0.0
  %155 = vmatprep.subr.mxu0 0.0
  %156 = vmatpush1.msra.mxu0 0.0
  %157 = vmatprep.subr.mxu0 0.0
  %158 = vmatpush1.msra.mxu0 0.0
  %159 = vmatprep.subr.mxu0 0.0
  %160 = vmatpush1.msra.mxu0 0.0
  %161 = vmatprep.subr.mxu0 0.0
  %162 = vmatpush1.msra.mxu0 0.0
  %163 = vmatprep.subr.mxu0 0.0
  %164 = vmatpush1.msra.mxu0 0.0
  %165 = vmatprep.subr.mxu0 0.0
  %166 = vmatpush1.msra.mxu0 0.0
  %167 = vmatprep.subr.mxu0 0.0
  %168 = vmatpush1.msra.mxu0 0.0
  %169 = vmatprep.subr.mxu0 0.0
  %170 = vmatpush1.msra.mxu0 0.0
  %171 = vmatprep.subr.mxu0 0.0
  %172 = vmatpush1.msra.mxu0 0.0
  %173 = vmatprep.subr.mxu0 0.0
  %174 = vmatpush1.msra.mxu0 0.0
  %175 = vmatprep.subr.mxu0 0.0
  %176 = vmatpush1.msra.mxu0 0.0
  %177 = vmatprep.subr.mxu0 0.0
  %178 = vmatpush1.msra.mxu0 0.0
  %179 = vmatprep.subr.mxu0 0.0
  %180 = vmatpush1.msra.mxu0 0.0
  %181 = vmatprep.subr.mxu0 0.0
  %182 = vmatpush1.msra.mxu0 0.0
  %183 = vmatprep.subr.mxu0 0.0
  %184 = vmatpush1.msra.mxu0 0.0
  %185 = vmatprep.subr.mxu0 0.0
  %186 = vmatpush1.msra.mxu0 0.0
  %187 = vmatprep.subr.mxu0 0.0
  %188 = vmatpush1.msra.mxu0 0.0
  %189 = vmatprep.subr.mxu0 0.0
  %190 = vmatpush1.msra.mxu0 0.0
  %191 = vmatprep.subr.mxu0 0.0
  %192 = vmatpush1.msra.mxu0 0.0
  %193 = vmatprep.subr.mxu0 0.0
  %194 = vmatpush1.msra.mxu0 0.0
  %195 = vmatprep.subr.mxu0 0.0
  %196 = vmatpush1.msra.mxu0 0.0
  %197 = vmatprep.subr.mxu0 0.0
  %198 = vmatpush1.msra.mxu0 0.0
  %199 = vmatprep.mubr.f32.mxu0 0.0
  %200 = vmatmul.mubr.f32.gmra.mrb[0].mxu0 %v131
  %v201 = vpop.f32.mrb[0].mxu0
  %v202 = vadd.f32 %v123, %v201
  %v203 = vpop.f32.mrb[0].mxu0
  %204 = vmatprep.mubr.f32.mxu0 0.0
  %205 = vmatmul.mubr.f32.gmra.mrb[0].mxu0 %v133
  %v206 = vpop.f32.mrb[0].mxu0
  %v207 = vadd.f32 %v128, %v206
  %v208 = vpop.f32.mrb[0].mxu0
  %209 = vdwg.mxu0
  %212 = vrot.lane.b32.xlu0 %v202, 127
  %v213 = vpop.permute.xlu0 %212
  %214 = vrot.lane.b32.xlu0 %v207, 127
  %v215 = vpop.permute.xlu0 %214
  %v218 = vmax.f32 %v202, %v213
  %v219 = vmax.f32 %v207, %v215
  %v220 = vmax.f32 %v218, 0.0
  %v221 = vmax.f32 %v219, 0.0
  %222 = vst [vmem:[%s3] sm:$0xff] %v220
  %223 = vst [vmem:[%s3 + $0x8] sm:$0xff] %v221
  // Predicated region
  $region14: #{_lambda_.1} parent=0 // pred_check
    _
  $region15: #{_lambda_.1} parent=0 // pred_check_branch
    %225 = sbr.rel (0) target = $region17
  $region16: #{_lambda_.1} parent=0 // pred_region
    _
  $region17: #{_lambda_.1} parent=0 // pred_fallthru
    _
  // Predicated region
  $region18: #{_lambda_.1} parent=0 // pred_check
    _
  $region19: #{_lambda_.1} parent=0 // pred_check_branch
    %227 = sbr.rel (0) target = $region21
  $region20: #{_lambda_.1} parent=0 // pred_region
    _
  $region21: #{_lambda_.1} parent=0 // pred_fallthru
    _

</llo_original>
